<compile_context>
chip_gen: v7x
topology: tpu7x:2x2x1
jax: 0.10.0
libtpu: 0.0.40
codegen_flags: <defaults>
</compile_context>

<pallas_src>
import functools

import jax
import jax.numpy as jnp
from jax.experimental import pallas as pl
from jax.experimental.pallas import tpu as pltpu  # noqa: F401  (TPU backend assumed)

_LANE = 128


def _make_pool_fc_kernel(n_inputs):
    """Kernel: for each of n_inputs (B, C, T) tiles -> mean over T in f32
    (XLU lane reduce, free under the MXU), one (B,C)x(C,OUT_pad) MXU dot with
    f32 accumulation, f32 bias add, single cast on a full-tile store."""

    def kernel(*refs):
        x_refs = refs[:n_inputs]
        w_ref, b_ref, o_ref = refs[n_inputs], refs[n_inputs + 1], refs[n_inputs + 2]
        w = w_ref[...]                                   # (C, OUT_pad) compute dtype
        b = b_ref[...]                                   # (1, OUT_pad) f32
        inv_t = 1.0 / x_refs[0].shape[-1]
        # Only force HIGHEST (multi-pass) when the MXU operands are f32;
        # bf16 x bf16 -> f32 is already the native single-pass mode.
        prec = jax.lax.Precision.HIGHEST if w.dtype == jnp.float32 else None
        for i, x_ref in enumerate(x_refs):               # static unroll (1 or 2)
            # Temporal mean in f32 for accuracy, then narrow to the MXU dtype.
            xm = jnp.sum(x_ref[...].astype(jnp.float32), axis=-1) * inv_t   # (B, C)
            acc = jnp.dot(xm.astype(w.dtype), w,
                          preferred_element_type=jnp.float32,
                          precision=prec)                # (B, OUT_pad) f32
            o_ref[i] = (acc + b).astype(o_ref.dtype)     # full-tile lane-dense store

    return kernel


@functools.lru_cache(maxsize=None)
def _build_pool_fc_call(n_inputs, B, C, T, out_pad):
    """Build (and cache per shape signature) the gridless pallas_call."""
    x_spec = pl.BlockSpec((B, C, T), lambda: (0, 0, 0))
    in_specs = [x_spec] * n_inputs + [
        pl.BlockSpec((C, out_pad), lambda: (0, 0)),      # weight (C, OUT_pad)
        pl.BlockSpec((1, out_pad), lambda: (0, 0)),      # bias   (1, OUT_pad)
    ]
    return pl.pallas_call(
        _make_pool_fc_kernel(n_inputs),
        out_shape=jax.ShapeDtypeStruct((n_inputs, B, out_pad), jnp.float32),
        in_specs=in_specs,
        out_specs=pl.BlockSpec((n_inputs, B, out_pad), lambda: (0, 0, 0)),
    )


class PartFC3:
    """JAX/Pallas port of Part_FC_3 (avgpool over T -> fc -> per-speaker split)."""

    def __init__(self, in_channels, num_emed, n_spk, mode="train",
                 compute_dtype=jnp.bfloat16, key=None):
        self.num_emed = num_emed
        self.n_spk = n_spk
        self.mode = mode
        self.in_channels = in_channels
        self.out_features = num_emed * n_spk
        self.compute_dtype = compute_dtype
        if key is None:
            key = jax.random.PRNGKey(0)
        kw, kb = jax.random.split(key)
        # Deterministic synthetic init (nn.Linear-like uniform bound), kept in f32.
        bound = 1.0 / (in_channels ** 0.5)
        self.fc_w = jax.random.uniform(
            kw, (self.out_features, in_channels), jnp.float32, -bound, bound)
        self.fc_b = jax.random.uniform(
            kb, (self.out_features,), jnp.float32, -bound, bound)

        # One-time host prep: weight transposed to (C, OUT), OUT zero-padded to a
        # lane multiple (unmasked output store), cast once to the MXU compute
        # dtype.  Bias stays f32 (1, OUT_pad) and is NOT pre-broadcast (the VPU
        # add in the epilogue is free under the MXU).
        out_pad = max(_LANE, -(-self.out_features // _LANE) * _LANE)
        self.out_pad = out_pad
        self._w_pad = (jnp.zeros((in_channels, out_pad), compute_dtype)
                       .at[:, :self.out_features]
                       .set(self.fc_w.T.astype(compute_dtype)))
        self._b_pad = (jnp.zeros((1, out_pad), jnp.float32)
                       .at[0, :self.out_features].set(self.fc_b))

    def _fc_batched(self, xs):
        """xs: tuple of (B, C, T) activations -> (len(xs), B, n_spk, num_emed) f32."""
        B, C, T = xs[0].shape
        # TODO(synk): for large C (or many rows) that overflow VMEM, switch to a
        # gridded variant: row axis "parallel" (v7x has 2 TCs), reduction axis
        # "arbitrary" with an f32 accumulator, K-tile sized per generation
        # (smaller on v7x's 64 MiB VMEM than on v5e/v6e's 128 MiB) and an
        # explicit pltpu.CompilerParams(vmem_limit_bytes=...) with headroom.
        call = _build_pool_fc_call(len(xs), B, C, T, self.out_pad)
        xs = tuple(x.astype(self.compute_dtype) for x in xs)
        y = call(*xs, self._w_pad, self._b_pad)          # (n, B, OUT_pad) f32
        # Drop the lane padding once; a single contiguous reshape exposes the
        # per-speaker chunks (no n_spk lane-sparse column slices of width 8).
        return y[:, :, :self.out_features].reshape(
            len(xs), B, self.n_spk, self.num_emed)

    def _split(self, y3):
        # y3: (B, n_spk, num_emed).  Preserve the original list-of-features API.
        return [y3[:, i, :] for i in range(self.n_spk)]

    def forward_once(self, x):
        return self._split(self._fc_batched((x,))[0])

    def __call__(self, inp):
        if self.mode == "train":
            x0, x1 = inp[0], inp[1]
            # Both train-mode passes fused into ONE pallas_call via two input
            # refs -- no host-side concatenate, no extra HBM round-trip.
            y = self._fc_batched((x0, x1))               # (2, B, n_spk, num_emed)
            return (self._split(y[0]), self._split(y[1]))
        else:
            return self.forward_once(inp)


if __name__ == "__main__":
    # Small shapes consistent with the module: B=2, C=32 channels, T=16 frames,
    # num_emed=8 embeddings per speaker, n_spk=4 speakers -> fc: 32 -> 32.
    B, C, T = 2, 32, 16
    num_emed, n_spk = 8, 4

    key = jax.random.PRNGKey(0)
    k0, k1, kp = jax.random.split(key, 3)
    x0 = jax.random.normal(k0, (B, C, T), jnp.float32)
    x1 = jax.random.normal(k1, (B, C, T), jnp.float32)

    # Plain-JAX reference (mean -> matmul -> bias -> split), full f32.
    def ref_once(m, x):
        xm = jnp.mean(x, axis=-1)
        y = jnp.dot(xm, m.fc_w.T, precision=jax.lax.Precision.HIGHEST) + m.fc_b
        return [y[:, i * num_emed:(i + 1) * num_emed] for i in range(n_spk)]

    # --- bf16 compute path (default) ---
    model = PartFC3(in_channels=C, num_emed=num_emed, n_spk=n_spk,
                    mode="train", key=kp)
    feats, feats_ = model((x0, x1))
    jax.block_until_ready(feats)
    jax.block_until_ready(feats_)

    ref0, ref1 = ref_once(model, x0), ref_once(model, x1)
    tol = dict(atol=2e-2, rtol=2e-2)   # bf16 operands vs f32 reference
    assert all(jnp.allclose(a, b, **tol) for a, b in zip(feats, ref0)), \
        "Pallas kernel mismatch vs. JAX reference (train, bf16)"
    assert all(jnp.allclose(a, b, **tol) for a, b in zip(feats_, ref1)), \
        "Pallas kernel mismatch vs. JAX reference (train, bf16, second input)"
    assert len(feats) == n_spk and feats[0].shape == (B, num_emed)

    # --- f32 compute path (tight check) ---
    model32 = PartFC3(in_channels=C, num_emed=num_emed, n_spk=n_spk,
                      mode="train", compute_dtype=jnp.float32, key=kp)
    f32a, f32b = model32((x0, x1))
    jax.block_until_ready(f32a)
    tight = dict(atol=1e-4, rtol=1e-4)
    assert all(jnp.allclose(a, b, **tight) for a, b in zip(f32a, ref0)), \
        "Pallas kernel mismatch vs. JAX reference (train, f32)"
    assert all(jnp.allclose(a, b, **tight) for a, b in zip(f32b, ref1)), \
        "Pallas kernel mismatch vs. JAX reference (train, f32, second input)"

    # --- eval-mode path (single input) ---
    model_eval = PartFC3(in_channels=C, num_emed=num_emed, n_spk=n_spk,
                         mode="eval", key=kp)
    feats_eval = model_eval(x0)
    jax.block_until_ready(feats_eval)
    assert all(jnp.allclose(a, b, **tol) for a, b in zip(feats_eval, ref0)), \
        "Pallas kernel mismatch vs. JAX reference (eval mode)"

    print("KERNEL_OK")
</pallas_src>

<mosaic_0001>
module attributes {stable_mosaic.version = 11 : i64} {
  func.func @kernel(%arg0: memref<2x32x16xbf16, #tpu.memory_space<vmem>>, %arg1: memref<2x32x16xbf16, #tpu.memory_space<vmem>>, %arg2: memref<32x128xbf16, #tpu.memory_space<vmem>>, %arg3: memref<1x128xf32, #tpu.memory_space<vmem>>, %arg4: memref<2x2x128xf32, #tpu.memory_space<vmem>>) attributes {dimension_semantics = [], scalar_prefetch = 0 : i64, scratch_operands = 0 : i64, tpu.core_type = #tpu.core_type<tc>} {
    %c0 = arith.constant 0 : index
    %c0_0 = arith.constant 0 : index
    %0 = vector.load %arg2[%c0, %c0_0] : memref<32x128xbf16, #tpu.memory_space<vmem>>, vector<32x128xbf16>
    %c0_1 = arith.constant 0 : index
    %c0_2 = arith.constant 0 : index
    %1 = vector.load %arg3[%c0_1, %c0_2] : memref<1x128xf32, #tpu.memory_space<vmem>>, vector<1x128xf32>
    %c0_3 = arith.constant 0 : index
    %c0_4 = arith.constant 0 : index
    %c0_5 = arith.constant 0 : index
    %2 = vector.load %arg0[%c0_3, %c0_4, %c0_5] : memref<2x32x16xbf16, #tpu.memory_space<vmem>>, vector<2x32x16xbf16>
    %3 = arith.extf %2 : vector<2x32x16xbf16> to vector<2x32x16xf32>
    %cst = arith.constant dense<0.000000e+00> : vector<2x32xf32>
    %4 = vector.multi_reduction <add>, %3, %cst [2] : vector<2x32x16xf32> to vector<2x32xf32>
    %cst_6 = arith.constant 6.250000e-02 : f32
    %5 = vector.broadcast %cst_6 : f32 to vector<2x32xf32>
    %6 = arith.mulf %4, %5 : vector<2x32xf32>
    %7 = arith.truncf %6 : vector<2x32xf32> to vector<2x32xbf16>
    %cst_7 = arith.constant dense<0.000000e+00> : vector<2x128xf32>
    %8 = tpu.matmul %7, %0, %cst_7 {dimension_numbers = #tpu.dot_dimension_numbers<[1], [0], [0], [1], [0, 0, 1, 1], [], []>} : vector<2x32xbf16>, vector<32x128xbf16>, vector<2x128xf32> -> vector<2x128xf32>
    %9 = vector.broadcast %1 : vector<1x128xf32> to vector<2x128xf32>
    %10 = arith.addf %8, %9 : vector<2x128xf32>
    %c0_8 = arith.constant 0 : index
    %c0_9 = arith.constant 0 : index
    %c0_10 = arith.constant 0 : index
    %11 = vector.load %arg4[%c0_8, %c0_9, %c0_10] : memref<2x2x128xf32, #tpu.memory_space<vmem>>, vector<1x2x128xf32>
    %12 = vector.shape_cast %11 : vector<1x2x128xf32> to vector<2x128xf32>
    %13 = vector.shape_cast %10 : vector<2x128xf32> to vector<1x2x128xf32>
    tpu.vector_store %arg4[%c0_8, %c0_9, %c0_10], %13 {strides = array<i32>} : memref<2x2x128xf32, #tpu.memory_space<vmem>>, vector<1x2x128xf32>,
    %c0_11 = arith.constant 0 : index
    %c0_12 = arith.constant 0 : index
    %c0_13 = arith.constant 0 : index
    %14 = vector.load %arg1[%c0_11, %c0_12, %c0_13] : memref<2x32x16xbf16, #tpu.memory_space<vmem>>, vector<2x32x16xbf16>
    %15 = arith.extf %14 : vector<2x32x16xbf16> to vector<2x32x16xf32>
    %cst_14 = arith.constant dense<0.000000e+00> : vector<2x32xf32>
    %16 = vector.multi_reduction <add>, %15, %cst_14 [2] : vector<2x32x16xf32> to vector<2x32xf32>
    %cst_15 = arith.constant 6.250000e-02 : f32
    %17 = vector.broadcast %cst_15 : f32 to vector<2x32xf32>
    %18 = arith.mulf %16, %17 : vector<2x32xf32>
    %19 = arith.truncf %18 : vector<2x32xf32> to vector<2x32xbf16>
    %cst_16 = arith.constant dense<0.000000e+00> : vector<2x128xf32>
    %20 = tpu.matmul %19, %0, %cst_16 {dimension_numbers = #tpu.dot_dimension_numbers<[1], [0], [0], [1], [0, 0, 1, 1], [], []>} : vector<2x32xbf16>, vector<32x128xbf16>, vector<2x128xf32> -> vector<2x128xf32>
    %21 = vector.broadcast %1 : vector<1x128xf32> to vector<2x128xf32>
    %22 = arith.addf %20, %21 : vector<2x128xf32>
    %c1 = arith.constant 1 : index
    %c0_17 = arith.constant 0 : index
    %c0_18 = arith.constant 0 : index
    %23 = vector.load %arg4[%c1, %c0_17, %c0_18] : memref<2x2x128xf32, #tpu.memory_space<vmem>>, vector<1x2x128xf32>
    %24 = vector.shape_cast %23 : vector<1x2x128xf32> to vector<2x128xf32>
    %25 = vector.shape_cast %22 : vector<2x128xf32> to vector<1x2x128xf32>
    tpu.vector_store %arg4[%c1, %c0_17, %c0_18], %25 {strides = array<i32>} : memref<2x2x128xf32, #tpu.memory_space<vmem>>, vector<1x2x128xf32>,
    return
  }
}

</mosaic_0001>

<llo_original>
// kernel: tpu_custom_call.1
$region0: #{tpu_custom_call.1}
  #allocation0 [shape = 'u32[]', space=smem, size = 0x4, offset = 0x4, fixed_abs, tag = 'smem constant byte address 0x4 - core index']
  #allocation1 [shape = 'u32[144,128]{1,0:T(1,128)}', space=vmem, size = 0x12000, scoped, tag = 'internal scratch']
  %s0 = inlined_call_operand.vmem [shape: bf16[2,32,16], index: 0, kind: input, shape index: {}]
  %s1 = inlined_call_operand.vmem [shape: bf16[2,32,16], index: 1, kind: input, shape index: {}]
  %s2 = inlined_call_operand.vmem [shape: bf16[32,128], index: 2, kind: input, shape index: {}]
  %s3 = inlined_call_operand.vmem [shape: f32[1,128], index: 3, kind: input, shape index: {}]
  %s4 = inlined_call_operand.hbm [shape: f32[2,2,128], index: 4, kind: output, shape index: {}]
  %s5 = sld [smem:[#allocation0]]
  $region26: #{tpu_custom_call.1} parent=0
    _
  %s7 = ssub.s32 1, %s5
  %s8 = scalar_select 0, %s7, %s5
  $region1: #{tpu_custom_call.1} parent=0
    #allocation2 [shape = 'u8[2048]{0}', space=vmem, size = 0x800, scoped, tag = 'output window, operand 0, single buffered']
    #allocation3 [shape = 's32[1]{0}', space=sflag, size = 0x4, scoped, tag = 'scoped memory for tpu_custom_call.1']
    %9 = vsyncpa [#allocation3], 0
    // Predicated region
    $region2: #{tpu_custom_call.1} parent=1 // pred_check
      _
    $region3: #{tpu_custom_call.1} parent=1 // pred_check_branch
      %11 = sbr.rel (0) target = $region5
    $region4: #{tpu_custom_call.1} parent=1 // pred_region
      _
    $region5: #{tpu_custom_call.1} parent=1 // pred_fallthru
      _
    // Predicated region
    $region6: #{tpu_custom_call.1} parent=1 // pred_check
      _
    $region7: #{tpu_custom_call.1} parent=1 // pred_check_branch
      %13 = sbr.rel (0) target = $region9
    $region8: #{tpu_custom_call.1} parent=1 // pred_region
      _
    $region9: #{tpu_custom_call.1} parent=1 // pred_fallthru
      _
    // Predicated region
    $region10: #{tpu_custom_call.1} parent=1 // pred_check
      _
    $region11: #{tpu_custom_call.1} parent=1 // pred_check_branch
      %15 = sbr.rel (0) target = $region13
    $region12: #{tpu_custom_call.1} parent=1 // pred_region
      _
    $region13: #{tpu_custom_call.1} parent=1 // pred_fallthru
      _
    // Predicated region
    $region14: #{tpu_custom_call.1} parent=1 // pred_check
      _
    $region15: #{tpu_custom_call.1} parent=1 // pred_check_branch
      %17 = sbr.rel (0) target = $region17
    $region16: #{tpu_custom_call.1} parent=1 // pred_region
      _
    $region17: #{tpu_custom_call.1} parent=1 // pred_fallthru
      _
    %v19 = vld [vmem:[%s2] sm:$0xf]
    %v20 = vld [vmem:[%s2 + $0x4] sm:$0xf]
    %v21 = vld [vmem:[%s2 + $0x8] sm:$0xf]
    %v22 = vld [vmem:[%s2 + $0xc] sm:$0xf]
    %v23 = vld [vmem:[%s3] sm:$0x1]
    %v24 = vld [vmem:[%s0] sm:$0xf]
    %v25 = vld [vmem:[%s0 + $0x4] sm:$0xf]
    %v26 = vld [vmem:[%s0 + $0x8] sm:$0xf]
    %v27 = vld [vmem:[%s0 + $0xc] sm:$0xf]
    %v28 = vld [vmem:[%s0 + $0x10] sm:$0xf]
    %v29 = vld [vmem:[%s0 + $0x14] sm:$0xf]
    %v30 = vld [vmem:[%s0 + $0x18] sm:$0xf]
    %v31 = vld [vmem:[%s0 + $0x1c] sm:$0xf]
    %v32 = vunpack.c.l.bf16 %v24
    %v33 = vunpack.c.l.bf16 %v25
    %v34 = vunpack.c.l.bf16 %v26
    %v35 = vunpack.c.l.bf16 %v27
    %v36 = vunpack.c.l.bf16 %v28
    %v37 = vunpack.c.l.bf16 %v29
    %v38 = vunpack.c.l.bf16 %v30
    %v39 = vunpack.c.l.bf16 %v31
    %vm40 = vcmask 130048
    %v41 = vsel %vm40, %v32, 0.0
    %42 = vadd.xlane.f32.xlu0 %v41
    %v43 = vpop.xlane.xlu0 %42
    %v44 = vsel %vm40, %v33, 0.0
    %45 = vadd.xlane.f32.xlu0 %v44
    %v46 = vpop.xlane.xlu0 %45
    %v47 = vsel %vm40, %v34, 0.0
    %48 = vadd.xlane.f32.xlu0 %v47
    %v49 = vpop.xlane.xlu0 %48
    %v50 = vsel %vm40, %v35, 0.0
    %51 = vadd.xlane.f32.xlu0 %v50
    %v52 = vpop.xlane.xlu0 %51
    %v53 = vsel %vm40, %v36, 0.0
    %54 = vadd.xlane.f32.xlu0 %v53
    %v55 = vpop.xlane.xlu0 %54
    %v56 = vsel %vm40, %v37, 0.0
    %57 = vadd.xlane.f32.xlu0 %v56
    %v58 = vpop.xlane.xlu0 %57
    %v59 = vsel %vm40, %v38, 0.0
    %60 = vadd.xlane.f32.xlu0 %v59
    %v61 = vpop.xlane.xlu0 %60
    %v62 = vsel %vm40, %v39, 0.0
    %63 = vadd.xlane.f32.xlu0 %v62
    %v64 = vpop.xlane.xlu0 %63
    %v65 = vmul.f32 %v43, 0.0625
    %v66 = vmul.f32 %v46, 0.0625
    %v67 = vmul.f32 %v49, 0.0625
    %v68 = vmul.f32 %v52, 0.0625
    %v69 = vmul.f32 %v55, 0.0625
    %v70 = vmul.f32 %v58, 0.0625
    %v71 = vmul.f32 %v61, 0.0625
    %v72 = vmul.f32 %v64, 0.0625
    %v73 = vpack.c.bf16 %v66, %v65
    %v74 = vpack.c.bf16 %v68, %v67
    %v75 = vpack.c.bf16 %v70, %v69
    %v76 = vpack.c.bf16 %v72, %v71
    %v78 = vlaneseq
    %v79 = vshrl.u32 %v78, 7
    %v80 = vsub.s32 0, %v79
    %v81 = vrot.slane %v23, %v80
    %v87 = vunpack.c.l.b16 %v73
    %v88 = vunpack.c.h.b16 %v73
    %v89 = vunpack.c.l.b16 %v74
    %v90 = vunpack.c.h.b16 %v74
    %v91 = vunpack.c.l.b16 %v75
    %v92 = vunpack.c.h.b16 %v75
    %v93 = vunpack.c.l.b16 %v76
    %v94 = vunpack.c.h.b16 %v76
    %v95 = vlaneseq
    %v96 = vand.u32 %v95, 127
    %v97 = vlaneseq
    %v98 = vshrl.u32 %v97, 7
    %v99 = vsub.s32 %v96, %v98
    %v100 = vrot.slane %v87, %v99
    %v101 = vadd.s32 %v96, 4294967288
    %v102 = vlaneseq
    %v103 = vshrl.u32 %v102, 7
    %v104 = vsub.s32 %v101, %v103
    %v105 = vrot.slane %v88, %v104
    %vm106 = vcmask 130112
    %v107 = vsel %vm106, %v105, %v100
    %v108 = vadd.s32 %v96, 4294967280
    %v109 = vlaneseq
    %v110 = vshrl.u32 %v109, 7
    %v111 = vsub.s32 %v108, %v110
    %v112 = vrot.slane %v89, %v111
    %vm113 = vcmask 195712
    %v114 = vsel %vm113, %v112, %v107
    %v115 = vadd.s32 %v96, 4294967272
    %v116 = vlaneseq
    %v117 = vshrl.u32 %v116, 7
    %v118 = vsub.s32 %v115, %v117
    %v119 = vrot.slane %v90, %v118
    %vm120 = vcmask 261312
    %v121 = vsel %vm120, %v119, %v114
    %v122 = vlaneseq
    %v123 = vshrl.u32 %v122, 7
    %v124 = vsub.s32 %v96, %v123
    %v125 = vrot.slane %v91, %v124
    %v126 = vlaneseq
    %v127 = vshrl.u32 %v126, 7
    %v128 = vsub.s32 %v101, %v127
    %v129 = vrot.slane %v92, %v128
    %v130 = vsel %vm106, %v129, %v125
    %v131 = vlaneseq
    %v132 = vshrl.u32 %v131, 7
    %v133 = vsub.s32 %v108, %v132
    %v134 = vrot.slane %v93, %v133
    %v135 = vsel %vm113, %v134, %v130
    %v136 = vlaneseq
    %v137 = vshrl.u32 %v136, 7
    %v138 = vsub.s32 %v115, %v137
    %v139 = vrot.slane %v94, %v138
    %v140 = vsel %vm120, %v139, %v135
    %vm141 = vcmask 1041409
    %v142 = vsel %vm141, %v140, %v121
    %v143 = vpack.c.b16 %v142, %v142
    %v148 = vunpack.c.l.b16 %v19
    %v149 = vunpack.c.l.b16 %v20
    %v150 = vunpack.c.l.b16 %v21
    %v151 = vunpack.c.l.b16 %v22
    %v152 = vpack.c.b16 %v149, %v148
    %v153 = vpack.c.b16 %v151, %v150
    %vm156 = vcmask 261120
    %v158 = vsel %vm156, %v143, 0
    %160 = vmatprep.subr.bf16.mxu0 0
    %161 = vmatpush1.bf16.msra.mxu0 %v152
    %162 = vmatprep.subr.bf16.mxu0 0
    %163 = vmatpush1.bf16.msra.mxu0 %v153
    %164 = vmatprep.subr.bf16.mxu0 0
    %165 = vmatpush1.bf16.msra.mxu0 0
    %166 = vmatprep.subr.bf16.mxu0 0
    %167 = vmatpush1.bf16.msra.mxu0 0
    %168 = vmatprep.subr.bf16.mxu0 0
    %169 = vmatpush1.bf16.msra.mxu0 0
    %170 = vmatprep.subr.bf16.mxu0 0
    %171 = vmatpush1.bf16.msra.mxu0 0
    %172 = vmatprep.subr.bf16.mxu0 0
    %173 = vmatpush1.bf16.msra.mxu0 0
    %174 = vmatprep.subr.bf16.mxu0 0
    %175 = vmatpush1.bf16.msra.mxu0 0
    %176 = vmatprep.subr.bf16.mxu0 0
    %177 = vmatpush1.bf16.msra.mxu0 0
    %178 = vmatprep.subr.bf16.mxu0 0
    %179 = vmatpush1.bf16.msra.mxu0 0
    %180 = vmatprep.subr.bf16.mxu0 0
    %181 = vmatpush1.bf16.msra.mxu0 0
    %182 = vmatprep.subr.bf16.mxu0 0
    %183 = vmatpush1.bf16.msra.mxu0 0
    %184 = vmatprep.subr.bf16.mxu0 0
    %185 = vmatpush1.bf16.msra.mxu0 0
    %186 = vmatprep.subr.bf16.mxu0 0
    %187 = vmatpush1.bf16.msra.mxu0 0
    %188 = vmatprep.subr.bf16.mxu0 0
    %189 = vmatpush1.bf16.msra.mxu0 0
    %190 = vmatprep.subr.bf16.mxu0 0
    %191 = vmatpush1.bf16.msra.mxu0 0
    %192 = vmatprep.mubr.bf16.mxu0 0
    %193 = vmatmul.mubr.bf16.gmra.mrb[0].mxu0 %v158
    %v194 = vpop.f32.mrb[0].mxu0
    %v195 = vadd.f32 %v81, %v194
    %v196 = vpop.f32.mrb[0].mxu0
    %v197 = vpop.f32.mrb[0].mxu0
    %v198 = vpop.f32.mrb[0].mxu0
    %199 = vdwg.mxu0
    %200 = vst [vmem:[#allocation2] sm:$0x3] %v195
    %v201 = vld [vmem:[%s1] sm:$0xf]
    %v202 = vld [vmem:[%s1 + $0x4] sm:$0xf]
    %v203 = vld [vmem:[%s1 + $0x8] sm:$0xf]
    %v204 = vld [vmem:[%s1 + $0xc] sm:$0xf]
    %v205 = vld [vmem:[%s1 + $0x10] sm:$0xf]
    %v206 = vld [vmem:[%s1 + $0x14] sm:$0xf]
    %v207 = vld [vmem:[%s1 + $0x18] sm:$0xf]
    %v208 = vld [vmem:[%s1 + $0x1c] sm:$0xf]
    %v209 = vunpack.c.l.bf16 %v201
    %v210 = vunpack.c.l.bf16 %v202
    %v211 = vunpack.c.l.bf16 %v203
    %v212 = vunpack.c.l.bf16 %v204
    %v213 = vunpack.c.l.bf16 %v205
    %v214 = vunpack.c.l.bf16 %v206
    %v215 = vunpack.c.l.bf16 %v207
    %v216 = vunpack.c.l.bf16 %v208
    %v217 = vsel %vm40, %v209, 0.0
    %218 = vadd.xlane.f32.xlu0 %v217
    %v219 = vpop.xlane.xlu0 %218
    %v220 = vsel %vm40, %v210, 0.0
    %221 = vadd.xlane.f32.xlu0 %v220
    %v222 = vpop.xlane.xlu0 %221
    %v223 = vsel %vm40, %v211, 0.0
    %224 = vadd.xlane.f32.xlu0 %v223
    %v225 = vpop.xlane.xlu0 %224
    %v226 = vsel %vm40, %v212, 0.0
    %227 = vadd.xlane.f32.xlu0 %v226
    %v228 = vpop.xlane.xlu0 %227
    %v229 = vsel %vm40, %v213, 0.0
    %230 = vadd.xlane.f32.xlu0 %v229
    %v231 = vpop.xlane.xlu0 %230
    %v232 = vsel %vm40, %v214, 0.0
    %233 = vadd.xlane.f32.xlu0 %v232
    %v234 = vpop.xlane.xlu0 %233
    %v235 = vsel %vm40, %v215, 0.0
    %236 = vadd.xlane.f32.xlu0 %v235
    %v237 = vpop.xlane.xlu0 %236
    %v238 = vsel %vm40, %v216, 0.0
    %239 = vadd.xlane.f32.xlu0 %v238
    %v240 = vpop.xlane.xlu0 %239
    %v241 = vmul.f32 %v219, 0.0625
    %v242 = vmul.f32 %v222, 0.0625
    %v243 = vmul.f32 %v225, 0.0625
    %v244 = vmul.f32 %v228, 0.0625
    %v245 = vmul.f32 %v231, 0.0625
    %v246 = vmul.f32 %v234, 0.0625
    %v247 = vmul.f32 %v237, 0.0625
    %v248 = vmul.f32 %v240, 0.0625
    %v249 = vpack.c.bf16 %v242, %v241
    %v250 = vpack.c.bf16 %v244, %v243
    %v251 = vpack.c.bf16 %v246, %v245
    %v252 = vpack.c.bf16 %v248, %v247
    %v257 = vunpack.c.l.b16 %v249
    %v258 = vunpack.c.h.b16 %v249
    %v259 = vunpack.c.l.b16 %v250
    %v260 = vunpack.c.h.b16 %v250
    %v261 = vunpack.c.l.b16 %v251
    %v262 = vunpack.c.h.b16 %v251
    %v263 = vunpack.c.l.b16 %v252
    %v264 = vunpack.c.h.b16 %v252
    %v265 = vlaneseq
    %v266 = vshrl.u32 %v265, 7
    %v267 = vsub.s32 %v96, %v266
    %v268 = vrot.slane %v257, %v267
    %v269 = vlaneseq
    %v270 = vshrl.u32 %v269, 7
    %v271 = vsub.s32 %v101, %v270
    %v272 = vrot.slane %v258, %v271
    %v273 = vsel %vm106, %v272, %v268
    %v274 = vlaneseq
    %v275 = vshrl.u32 %v274, 7
    %v276 = vsub.s32 %v108, %v275
    %v277 = vrot.slane %v259, %v276
    %v278 = vsel %vm113, %v277, %v273
    %v279 = vlaneseq
    %v280 = vshrl.u32 %v279, 7
    %v281 = vsub.s32 %v115, %v280
    %v282 = vrot.slane %v260, %v281
    %v283 = vsel %vm120, %v282, %v278
    %v284 = vlaneseq
    %v285 = vshrl.u32 %v284, 7
    %v286 = vsub.s32 %v96, %v285
    %v287 = vrot.slane %v261, %v286
    %v288 = vlaneseq
    %v289 = vshrl.u32 %v288, 7
    %v290 = vsub.s32 %v101, %v289
    %v291 = vrot.slane %v262, %v290
    %v292 = vsel %vm106, %v291, %v287
    %v293 = vlaneseq
    %v294 = vshrl.u32 %v293, 7
    %v295 = vsub.s32 %v108, %v294
    %v296 = vrot.slane %v263, %v295
    %v297 = vsel %vm113, %v296, %v292
    %v298 = vlaneseq
    %v299 = vshrl.u32 %v298, 7
    %v300 = vsub.s32 %v115, %v299
    %v301 = vrot.slane %v264, %v300
    %v302 = vsel %vm120, %v301, %v297
    %v303 = vsel %vm141, %v302, %v283
    %v304 = vpack.c.b16 %v303, %v303
    %v306 = vsel %vm156, %v304, 0
    %308 = vmatprep.subr.bf16.mxu0 0
    %309 = vmatpush1.bf16.msra.mxu0 %v152
    %310 = vmatprep.subr.bf16.mxu0 0
    %311 = vmatpush1.bf16.msra.mxu0 %v153
    %312 = vmatprep.subr.bf16.mxu0 0
    %313 = vmatpush1.bf16.msra.mxu0 0
    %314 = vmatprep.subr.bf16.mxu0 0
    %315 = vmatpush1.bf16.msra.mxu0 0
    %316 = vmatprep.subr.bf16.mxu0 0
    %317 = vmatpush1.bf16.msra.mxu0 0
    %318 = vmatprep.subr.bf16.mxu0 0
    %319 = vmatpush1.bf16.msra.mxu0 0
    %320 = vmatprep.subr.bf16.mxu0 0
    %321 = vmatpush1.bf16.msra.mxu0 0
    %322 = vmatprep.subr.bf16.mxu0 0
    %323 = vmatpush1.bf16.msra.mxu0 0
    %324 = vmatprep.subr.bf16.mxu0 0
    %325 = vmatpush1.bf16.msra.mxu0 0
    %326 = vmatprep.subr.bf16.mxu0 0
    %327 = vmatpush1.bf16.msra.mxu0 0
    %328 = vmatprep.subr.bf16.mxu0 0
    %329 = vmatpush1.bf16.msra.mxu0 0
    %330 = vmatprep.subr.bf16.mxu0 0
    %331 = vmatpush1.bf16.msra.mxu0 0
    %332 = vmatprep.subr.bf16.mxu0 0
    %333 = vmatpush1.bf16.msra.mxu0 0
    %334 = vmatprep.subr.bf16.mxu0 0
    %335 = vmatpush1.bf16.msra.mxu0 0
    %336 = vmatprep.subr.bf16.mxu0 0
    %337 = vmatpush1.bf16.msra.mxu0 0
    %338 = vmatprep.subr.bf16.mxu0 0
    %339 = vmatpush1.bf16.msra.mxu0 0
    %340 = vmatprep.mubr.bf16.mxu0 0
    %341 = vmatmul.mubr.bf16.gmra.mrb[0].mxu0 %v306
    %v342 = vpop.f32.mrb[0].mxu0
    %v343 = vadd.f32 %v81, %v342
    %v344 = vpop.f32.mrb[0].mxu0
    %v345 = vpop.f32.mrb[0].mxu0
    %v346 = vpop.f32.mrb[0].mxu0
    %347 = vdwg.mxu0
    %s348 = scalar_lea.vmem [#allocation2], 2
    %349 = vst [vmem:[%s348] sm:$0x3] %v343
    // Predicated region
    $region18: #{tpu_custom_call.1} parent=1 // pred_check
      _
    $region19: #{tpu_custom_call.1} parent=1 // pred_check_branch
      %351 = sbr.rel (0) target = $region21
    $region20: #{tpu_custom_call.1} parent=1 // pred_region
      %s353 = ssub.s32 64, 64
      %354 = vsyncadd [#allocation3], %s353
      %s355 = sshll.u32 [#allocation2], 4
      %s356 = int_to_ptr.vmem [resolvable:$true] %s355
      %361 = dma.vmem_to_hbm [thread:$0]  %s356, 64, %s4, [#allocation3], 32, 32, 2
    $region21: #{tpu_custom_call.1} parent=1 // pred_fallthru
      _
    // Predicated region
    $region22: #{tpu_custom_call.1} parent=1 // pred_check
      _
    $region23: #{tpu_custom_call.1} parent=1 // pred_check_branch
      %363 = sbr.rel (0) target = $region25
    $region24: #{tpu_custom_call.1} parent=1 // pred_region
      %364 = dma.done [#allocation3], 64
    $region25: #{tpu_custom_call.1} parent=1 // pred_fallthru
      _
    %365 = vsyncpa [#allocation3], 1

</llo_original>
